<compile_context>
chip_gen: v6e
topology: v6e:2x2x1
jax: 0.10.0
libtpu: 0.0.40
codegen_flags: <defaults>
</compile_context>

<pallas_src>
import numpy as np
import jax
import jax.numpy as jnp
from jax import lax
from jax.experimental import pallas as pl
from jax.experimental.pallas import tpu as pltpu

CONV_BN_EPS = 1e-3    # ultralytics Conv: nn.BatchNorm2d(c2, eps=0.001)
BASIC_BN_EPS = 1e-5   # BasicConv:        nn.BatchNorm2d(out, eps=1e-05)


def _make_kernel(c, cm, c2, img_w):
    """Builds the fused C2f_FEM kernel with static channel sizes baked in."""
    b1_off = 0                  # cv1 bias                       (2c,)
    bf_off = 2 * c              # FEM branch0 | branch1[0] bias  (2*cm,)
    b13_off = bf_off + 2 * cm   # FEM branch1[1] (1x3) bias      (cm,)
    b31_off = b13_off + cm      # FEM branch1[2] (3x1) bias      (cm,)
    b2_off = b31_off + cm       # cv2 bias                       (c2,)

    def silu(v):
        # sigmoid(v) == 0.5*tanh(0.5*v) + 0.5  -> one EUP transcendental/elem
        return v * (0.5 * jnp.tanh(0.5 * v) + 0.5)

    def mm(w, a):
        # bf16 MXU operands, f32 accumulation
        return jnp.dot(w, a.astype(jnp.bfloat16),
                       preferred_element_type=jnp.float32)

    def kernel(x_ref, w1_ref, wf_ref, k13_ref, k31_ref, w2_ref, bias_ref,
               mask_ref, o_ref):
        x = x_ref[0]                                   # (c1, HW) bf16
        bias = bias_ref[...]                           # (Btot, 1) f32
        m_first = mask_ref[0:1, :]                     # 1.0 where w != 0
        m_last = mask_ref[1:2, :]                      # 1.0 where w != W-1

        # cv1 : 1x1 conv (BN folded into weight/bias) + SiLU -> t = [y0 ; y1]
        t = silu(mm(w1_ref[...], x) + bias[b1_off:b1_off + 2 * c])
        y1 = t[c:]                                     # (c, HW)

        # FEM branch0 and branch1[0] share the same input -> one fused matmul
        u = silu(mm(wf_ref[...], y1) + bias[bf_off:bf_off + 2 * cm])
        x0 = u[:cm]                                    # branch0 output
        u1 = u[cm:]                                    # branch1[0] output

        # FEM branch1[1] : (1,3) conv, padding (0,1)
        #   out[:,h,w] = A0[:,h,w-1] + A1[:,h,w] + A2[:,h,w+1]
        a = mm(k13_ref[...], u1)                       # (3*cm, HW)
        a0, a1, a2 = a[:cm], a[cm:2 * cm], a[2 * cm:]
        zc = jnp.zeros((cm, 1), jnp.float32)
        h13 = (a1
               + jnp.concatenate([zc, a0[:, :-1]], axis=1) * m_first
               + jnp.concatenate([a2[:, 1:], zc], axis=1) * m_last)
        v = silu(h13 + bias[b13_off:b13_off + cm])

        # FEM branch1[2] : (3,1) conv, padding (1,0)
        #   out[:,h,w] = B0[:,h-1,w] + B1[:,h,w] + B2[:,h+1,w]
        bmat = mm(k31_ref[...], v)                     # (3*cm, HW)
        b0, b1, b2 = bmat[:cm], bmat[cm:2 * cm], bmat[2 * cm:]
        zr = jnp.zeros((cm, img_w), jnp.float32)
        h31 = (b1
               + jnp.concatenate([zr, b0[:, :-img_w]], axis=1)
               + jnp.concatenate([b2[:, img_w:], zr], axis=1))
        x1 = silu(h31 + bias[b31_off:b31_off + cm])

        # cv2 : 1x1 conv over cat(y0, y1, x0, x1) -- concat stays in VMEM
        cat = jnp.concatenate([t, x0, x1], axis=0)     # (2c + 2cm, HW)
        y = mm(w2_ref[...], cat) + bias[b2_off:b2_off + c2]
        o_ref[0] = silu(y).astype(o_ref.dtype)

    return kernel


def c2f_fem_forward(x, p):
    """C2f_FEM forward (inference) via the fused Pallas kernel.

    x: (B, c1, H, W) float array.  p: dict of conv/BN parameter dicts.
    Returns (B, c2, H, W) bfloat16.
    """
    B, c1, H, W = x.shape
    HW = H * W
    two_c = p["cv1"]["w"].shape[0]
    c = two_c // 2
    cm = p["b0"]["w"].shape[0]            # = 2 * inter_planes = c // 2
    c2 = p["cv2"]["w"].shape[0]

    def fold(cp, eps):
        # fold inference BatchNorm into the (bias-free) conv weight + a bias
        s = cp["g"] / jnp.sqrt(cp["v"] + eps)
        return cp["w"] * s.reshape(-1, 1, 1, 1), cp["b"] - cp["m"] * s

    w1, b1 = fold(p["cv1"], CONV_BN_EPS)
    wb0, bb0 = fold(p["b0"], BASIC_BN_EPS)
    wa, ba = fold(p["b1a"], BASIC_BN_EPS)
    wb, bb = fold(p["b1b"], BASIC_BN_EPS)
    wc, bc = fold(p["b1c"], BASIC_BN_EPS)
    w2, b2 = fold(p["cv2"], CONV_BN_EPS)

    bf16 = jnp.bfloat16
    w1m = w1[:, :, 0, 0].astype(bf16)                                    # (2c, c1)
    wfm = jnp.concatenate([wb0[:, :, 0, 0], wa[:, :, 0, 0]], 0).astype(bf16)   # (2cm, c)
    k13 = jnp.concatenate([wb[:, :, 0, j] for j in range(3)], 0).astype(bf16)  # (3cm, cm)
    k31 = jnp.concatenate([wc[:, :, j, 0] for j in range(3)], 0).astype(bf16)  # (3cm, cm)
    w2m = w2[:, :, 0, 0].astype(bf16)                                    # (c2, 2c+2cm)
    bias_all = jnp.concatenate([b1, bb0, ba, bb, bc, b2]).reshape(-1, 1).astype(jnp.float32)

    # row-boundary masks for the horizontal (1,3) conv shifts (lane layout = HW)
    wpos = np.arange(HW) % W
    masks = jnp.asarray(np.stack([(wpos != 0), (wpos != W - 1)]).astype(np.float32))

    kernel = _make_kernel(c, cm, c2, W)

    def const2d(shape):
        return pl.BlockSpec(shape, lambda b: (0, 0))

    flops = int(2 * B * HW * (two_c * c1 + 2 * cm * c + 6 * cm * cm
                              + c2 * (2 * c + 2 * cm)))
    trans = int(B * HW * (two_c + 4 * cm + c2))
    bytes_accessed = int(B * c1 * HW * 2 + B * c2 * HW * 2
                         + 2 * (w1m.size + wfm.size + k13.size + k31.size + w2m.size)
                         + 4 * (bias_all.size + masks.size))

    out = pl.pallas_call(
        kernel,
        out_shape=jax.ShapeDtypeStruct((B, c2, HW), jnp.bfloat16),
        grid=(B,),
        in_specs=[
            pl.BlockSpec((1, c1, HW), lambda b: (b, 0, 0)),   # x (bf16)
            const2d(w1m.shape),                               # cv1 weight
            const2d(wfm.shape),                               # FEM branch0|1a weight
            const2d(k13.shape),                               # (1,3) conv taps
            const2d(k31.shape),                               # (3,1) conv taps
            const2d(w2m.shape),                               # cv2 weight
            const2d(bias_all.shape),                          # packed biases
            const2d(masks.shape),                             # row-boundary masks
        ],
        out_specs=pl.BlockSpec((1, c2, HW), lambda b: (b, 0, 0)),
        compiler_params=pltpu.CompilerParams(
            dimension_semantics=("parallel",),
            vmem_limit_bytes=32 * 1024 * 1024),
        cost_estimate=pl.CostEstimate(flops=flops, transcendentals=trans,
                                      bytes_accessed=bytes_accessed),
    )(x.reshape(B, c1, HW).astype(bf16),
      w1m, wfm, k13, k31, w2m, bias_all, masks)

    return out.reshape(B, c2, H, W)


def reference_forward(x, p):
    """Pure-JAX f32 mirror of the PyTorch C2f_FEM forward (n=1)."""
    def conv_bn_silu(t, cp, eps, pad):
        y = lax.conv_general_dilated(t, cp["w"], window_strides=(1, 1),
                                     padding=pad,
                                     dimension_numbers=("NCHW", "OIHW", "NCHW"))
        s = cp["g"] / jnp.sqrt(cp["v"] + eps)
        y = y * s.reshape(1, -1, 1, 1) + (cp["b"] - cp["m"] * s).reshape(1, -1, 1, 1)
        return y * jax.nn.sigmoid(y)

    c = p["cv1"]["w"].shape[0] // 2
    t = conv_bn_silu(x, p["cv1"], CONV_BN_EPS, ((0, 0), (0, 0)))
    y0, y1 = t[:, :c], t[:, c:]
    x0 = conv_bn_silu(y1, p["b0"], BASIC_BN_EPS, ((0, 0), (0, 0)))
    u = conv_bn_silu(y1, p["b1a"], BASIC_BN_EPS, ((0, 0), (0, 0)))
    v = conv_bn_silu(u, p["b1b"], BASIC_BN_EPS, ((0, 0), (1, 1)))
    x1 = conv_bn_silu(v, p["b1c"], BASIC_BN_EPS, ((1, 1), (0, 0)))
    cat = jnp.concatenate([y0, y1, x0, x1], axis=1)
    return conv_bn_silu(cat, p["cv2"], CONV_BN_EPS, ((0, 0), (0, 0)))


if __name__ == "__main__":
    key = jax.random.PRNGKey(0)
    B, c1, c2 = 2, 32, 32
    H = W = 16
    c = int(c2 * 0.5)          # self.c = 16
    inter = c // 4             # FEM map_reduce = 4
    cm = 2 * inter             # per-branch FEM channels = 8

    def conv_params(k, co, ci, kh, kw):
        k1, k2, k3, k4, k5 = jax.random.split(k, 5)
        fan = ci * kh * kw
        return dict(
            w=jax.random.normal(k1, (co, ci, kh, kw), jnp.float32) / np.sqrt(fan),
            g=1.0 + 0.1 * jax.random.normal(k2, (co,), jnp.float32),
            b=0.1 * jax.random.normal(k3, (co,), jnp.float32),
            m=0.1 * jax.random.normal(k4, (co,), jnp.float32),
            v=1.0 + 0.1 * jnp.abs(jax.random.normal(k5, (co,), jnp.float32)),
        )

    ks = jax.random.split(key, 7)
    x = jax.random.normal(ks[0], (B, c1, H, W), jnp.float32)
    params = dict(
        cv1=conv_params(ks[1], 2 * c, c1, 1, 1),          # Conv(c1, 2c, 1, 1)
        b0=conv_params(ks[2], cm, c, 1, 1),               # FEM branch0 1x1
        b1a=conv_params(ks[3], cm, c, 1, 1),              # FEM branch1[0] 1x1
        b1b=conv_params(ks[4], cm, cm, 1, 3),             # FEM branch1[1] (1,3)
        b1c=conv_params(ks[5], cm, cm, 3, 1),             # FEM branch1[2] (3,1)
        cv2=conv_params(ks[6], c2, 2 * c + 2 * cm, 1, 1), # Conv(3c, c2, 1)
    )

    out = jax.block_until_ready(c2f_fem_forward(x, params))

    # reference sees the same bf16-rounded input the kernel reads from HBM
    x_q = x.astype(jnp.bfloat16).astype(jnp.float32)
    ref = reference_forward(x_q, params)

    assert out.shape == ref.shape == (B, c2, H, W)
    out_f = np.asarray(out.astype(jnp.float32))
    ref_f = np.asarray(ref)
    if not np.allclose(out_f, ref_f, atol=5e-2, rtol=5e-2):
        raise AssertionError(
            f"Pallas kernel does not match reference (max |diff| = "
            f"{np.max(np.abs(out_f - ref_f))})")
    print("KERNEL_OK")
</pallas_src>

<mosaic_0001>
module attributes {stable_mosaic.version = 11 : i64} {
  func.func @kernel(%arg0: i32, %arg1: memref<1x32x256xbf16, #tpu.memory_space<vmem>>, %arg2: memref<32x32xbf16, #tpu.memory_space<vmem>>, %arg3: memref<16x16xbf16, #tpu.memory_space<vmem>>, %arg4: memref<24x8xbf16, #tpu.memory_space<vmem>>, %arg5: memref<24x8xbf16, #tpu.memory_space<vmem>>, %arg6: memref<32x48xbf16, #tpu.memory_space<vmem>>, %arg7: memref<96x1xf32, #tpu.memory_space<vmem>>, %arg8: memref<2x256xf32, #tpu.memory_space<vmem>>, %arg9: memref<1x32x256xbf16, #tpu.memory_space<vmem>>) attributes {dimension_semantics = [#tpu.dimension_semantics<parallel>], iteration_bounds = array<i64: 2>, scalar_prefetch = 0 : i64, scratch_operands = 0 : i64, tpu.core_type = #tpu.core_type<tc>, window_params = [{transform_indices = @transform_0, window_bounds = array<i64: 1, 32, 256>}, {pipeline_mode = #tpu.pipeline_mode<synchronous>, transform_indices = @transform_1, window_bounds = array<i64: 32, 32>}, {pipeline_mode = #tpu.pipeline_mode<synchronous>, transform_indices = @transform_2, window_bounds = array<i64: 16, 16>}, {pipeline_mode = #tpu.pipeline_mode<synchronous>, transform_indices = @transform_3, window_bounds = array<i64: 24, 8>}, {pipeline_mode = #tpu.pipeline_mode<synchronous>, transform_indices = @transform_4, window_bounds = array<i64: 24, 8>}, {pipeline_mode = #tpu.pipeline_mode<synchronous>, transform_indices = @transform_5, window_bounds = array<i64: 32, 48>}, {pipeline_mode = #tpu.pipeline_mode<synchronous>, transform_indices = @transform_6, window_bounds = array<i64: 96, 1>}, {pipeline_mode = #tpu.pipeline_mode<synchronous>, transform_indices = @transform_7, window_bounds = array<i64: 2, 256>}, {transform_indices = @transform_8, window_bounds = array<i64: 1, 32, 256>}]} {
    %c0 = arith.constant 0 : index
    %c0_0 = arith.constant 0 : index
    %c0_1 = arith.constant 0 : index
    %0 = vector.load %arg1[%c0, %c0_0, %c0_1] : memref<1x32x256xbf16, #tpu.memory_space<vmem>>, vector<1x32x256xbf16>
    %1 = vector.shape_cast %0 : vector<1x32x256xbf16> to vector<32x256xbf16>
    %c0_2 = arith.constant 0 : index
    %c0_3 = arith.constant 0 : index
    %2 = vector.load %arg7[%c0_2, %c0_3] : memref<96x1xf32, #tpu.memory_space<vmem>>, vector<96x1xf32>
    %c0_4 = arith.constant 0 : index
    %c0_5 = arith.constant 0 : index
    %3 = vector.load %arg8[%c0_4, %c0_5] : memref<2x256xf32, #tpu.memory_space<vmem>>, vector<1x256xf32>
    %c1 = arith.constant 1 : index
    %c0_6 = arith.constant 0 : index
    %4 = vector.load %arg8[%c1, %c0_6] : memref<2x256xf32, #tpu.memory_space<vmem>>, vector<1x256xf32>
    %c0_7 = arith.constant 0 : index
    %c0_8 = arith.constant 0 : index
    %5 = vector.load %arg2[%c0_7, %c0_8] : memref<32x32xbf16, #tpu.memory_space<vmem>>, vector<32x32xbf16>
    %cst = arith.constant dense<0.000000e+00> : vector<32x256xf32>
    %6 = tpu.matmul %5, %1, %cst {dimension_numbers = #tpu.dot_dimension_numbers<[1], [0], [0], [1], [0, 0, 1, 1], [], []>} : vector<32x32xbf16>, vector<32x256xbf16>, vector<32x256xf32> -> vector<32x256xf32>
    %7 = vector.extract_strided_slice %2 {offsets = [0, 0], sizes = [32, 1], strides = [1, 1]} : vector<96x1xf32> to vector<32x1xf32>
    %8 = vector.broadcast %7 : vector<32x1xf32> to vector<32x256xf32>
    %9 = arith.addf %6, %8 : vector<32x256xf32>
    %cst_9 = arith.constant 5.000000e-01 : f32
    %10 = vector.broadcast %cst_9 : f32 to vector<32x256xf32>
    %11 = arith.mulf %10, %9 : vector<32x256xf32>
    %12 = math.tanh %11 : vector<32x256xf32>
    %cst_10 = arith.constant 5.000000e-01 : f32
    %13 = vector.broadcast %cst_10 : f32 to vector<32x256xf32>
    %14 = arith.mulf %13, %12 : vector<32x256xf32>
    %cst_11 = arith.constant 5.000000e-01 : f32
    %15 = vector.broadcast %cst_11 : f32 to vector<32x256xf32>
    %16 = arith.addf %14, %15 : vector<32x256xf32>
    %17 = arith.mulf %9, %16 : vector<32x256xf32>
    %18 = vector.extract_strided_slice %17 {offsets = [16, 0], sizes = [16, 256], strides = [1, 1]} : vector<32x256xf32> to vector<16x256xf32>
    %c0_12 = arith.constant 0 : index
    %c0_13 = arith.constant 0 : index
    %19 = vector.load %arg3[%c0_12, %c0_13] : memref<16x16xbf16, #tpu.memory_space<vmem>>, vector<16x16xbf16>
    %20 = arith.truncf %18 : vector<16x256xf32> to vector<16x256xbf16>
    %cst_14 = arith.constant dense<0.000000e+00> : vector<16x256xf32>
    %21 = tpu.matmul %19, %20, %cst_14 {dimension_numbers = #tpu.dot_dimension_numbers<[1], [0], [0], [1], [0, 0, 1, 1], [], []>} : vector<16x16xbf16>, vector<16x256xbf16>, vector<16x256xf32> -> vector<16x256xf32>
    %22 = vector.extract_strided_slice %2 {offsets = [32, 0], sizes = [16, 1], strides = [1, 1]} : vector<96x1xf32> to vector<16x1xf32>
    %23 = vector.broadcast %22 : vector<16x1xf32> to vector<16x256xf32>
    %24 = arith.addf %21, %23 : vector<16x256xf32>
    %cst_15 = arith.constant 5.000000e-01 : f32
    %25 = vector.broadcast %cst_15 : f32 to vector<16x256xf32>
    %26 = arith.mulf %25, %24 : vector<16x256xf32>
    %27 = math.tanh %26 : vector<16x256xf32>
    %cst_16 = arith.constant 5.000000e-01 : f32
    %28 = vector.broadcast %cst_16 : f32 to vector<16x256xf32>
    %29 = arith.mulf %28, %27 : vector<16x256xf32>
    %cst_17 = arith.constant 5.000000e-01 : f32
    %30 = vector.broadcast %cst_17 : f32 to vector<16x256xf32>
    %31 = arith.addf %29, %30 : vector<16x256xf32>
    %32 = arith.mulf %24, %31 : vector<16x256xf32>
    %33 = vector.extract_strided_slice %32 {offsets = [0, 0], sizes = [8, 256], strides = [1, 1]} : vector<16x256xf32> to vector<8x256xf32>
    %34 = vector.extract_strided_slice %32 {offsets = [8, 0], sizes = [8, 256], strides = [1, 1]} : vector<16x256xf32> to vector<8x256xf32>
    %c0_18 = arith.constant 0 : index
    %c0_19 = arith.constant 0 : index
    %35 = vector.load %arg4[%c0_18, %c0_19] : memref<24x8xbf16, #tpu.memory_space<vmem>>, vector<24x8xbf16>
    %36 = arith.truncf %34 : vector<8x256xf32> to vector<8x256xbf16>
    %cst_20 = arith.constant dense<0.000000e+00> : vector<24x256xf32>
    %37 = tpu.matmul %35, %36, %cst_20 {dimension_numbers = #tpu.dot_dimension_numbers<[1], [0], [0], [1], [0, 0, 1, 1], [], []>} : vector<24x8xbf16>, vector<8x256xbf16>, vector<24x256xf32> -> vector<24x256xf32>
    %38 = vector.extract_strided_slice %37 {offsets = [0, 0], sizes = [8, 256], strides = [1, 1]} : vector<24x256xf32> to vector<8x256xf32>
    %39 = vector.extract_strided_slice %37 {offsets = [8, 0], sizes = [8, 256], strides = [1, 1]} : vector<24x256xf32> to vector<8x256xf32>
    %40 = vector.extract_strided_slice %37 {offsets = [16, 0], sizes = [8, 256], strides = [1, 1]} : vector<24x256xf32> to vector<8x256xf32>
    %cst_21 = arith.constant 0.000000e+00 : f32
    %41 = vector.broadcast %cst_21 : f32 to vector<8x1xf32>
    %42 = vector.extract_strided_slice %38 {offsets = [0, 0], sizes = [8, 255], strides = [1, 1]} : vector<8x256xf32> to vector<8x255xf32>
    %43 = tpu.concatenate %41, %42 in 1 : vector<8x1xf32>, vector<8x255xf32> -> vector<8x256xf32>
    %44 = vector.broadcast %3 : vector<1x256xf32> to vector<8x256xf32>
    %45 = arith.mulf %43, %44 : vector<8x256xf32>
    %46 = arith.addf %39, %45 : vector<8x256xf32>
    %47 = vector.extract_strided_slice %40 {offsets = [0, 1], sizes = [8, 255], strides = [1, 1]} : vector<8x256xf32> to vector<8x255xf32>
    %48 = tpu.concatenate %47, %41 in 1 : vector<8x255xf32>, vector<8x1xf32> -> vector<8x256xf32>
    %49 = vector.broadcast %4 : vector<1x256xf32> to vector<8x256xf32>
    %50 = arith.mulf %48, %49 : vector<8x256xf32>
    %51 = arith.addf %46, %50 : vector<8x256xf32>
    %52 = vector.extract_strided_slice %2 {offsets = [48, 0], sizes = [8, 1], strides = [1, 1]} : vector<96x1xf32> to vector<8x1xf32>
    %53 = vector.broadcast %52 : vector<8x1xf32> to vector<8x256xf32>
    %54 = arith.addf %51, %53 : vector<8x256xf32>
    %cst_22 = arith.constant 5.000000e-01 : f32
    %55 = vector.broadcast %cst_22 : f32 to vector<8x256xf32>
    %56 = arith.mulf %55, %54 : vector<8x256xf32>
    %57 = math.tanh %56 : vector<8x256xf32>
    %cst_23 = arith.constant 5.000000e-01 : f32
    %58 = vector.broadcast %cst_23 : f32 to vector<8x256xf32>
    %59 = arith.mulf %58, %57 : vector<8x256xf32>
    %cst_24 = arith.constant 5.000000e-01 : f32
    %60 = vector.broadcast %cst_24 : f32 to vector<8x256xf32>
    %61 = arith.addf %59, %60 : vector<8x256xf32>
    %62 = arith.mulf %54, %61 : vector<8x256xf32>
    %c0_25 = arith.constant 0 : index
    %c0_26 = arith.constant 0 : index
    %63 = vector.load %arg5[%c0_25, %c0_26] : memref<24x8xbf16, #tpu.memory_space<vmem>>, vector<24x8xbf16>
    %64 = arith.truncf %62 : vector<8x256xf32> to vector<8x256xbf16>
    %cst_27 = arith.constant dense<0.000000e+00> : vector<24x256xf32>
    %65 = tpu.matmul %63, %64, %cst_27 {dimension_numbers = #tpu.dot_dimension_numbers<[1], [0], [0], [1], [0, 0, 1, 1], [], []>} : vector<24x8xbf16>, vector<8x256xbf16>, vector<24x256xf32> -> vector<24x256xf32>
    %66 = vector.extract_strided_slice %65 {offsets = [0, 0], sizes = [8, 256], strides = [1, 1]} : vector<24x256xf32> to vector<8x256xf32>
    %67 = vector.extract_strided_slice %65 {offsets = [8, 0], sizes = [8, 256], strides = [1, 1]} : vector<24x256xf32> to vector<8x256xf32>
    %68 = vector.extract_strided_slice %65 {offsets = [16, 0], sizes = [8, 256], strides = [1, 1]} : vector<24x256xf32> to vector<8x256xf32>
    %cst_28 = arith.constant 0.000000e+00 : f32
    %69 = vector.broadcast %cst_28 : f32 to vector<8x16xf32>
    %70 = vector.extract_strided_slice %66 {offsets = [0, 0], sizes = [8, 240], strides = [1, 1]} : vector<8x256xf32> to vector<8x240xf32>
    %71 = tpu.concatenate %69, %70 in 1 : vector<8x16xf32>, vector<8x240xf32> -> vector<8x256xf32>
    %72 = arith.addf %67, %71 : vector<8x256xf32>
    %73 = vector.extract_strided_slice %68 {offsets = [0, 16], sizes = [8, 240], strides = [1, 1]} : vector<8x256xf32> to vector<8x240xf32>
    %74 = tpu.concatenate %73, %69 in 1 : vector<8x240xf32>, vector<8x16xf32> -> vector<8x256xf32>
    %75 = arith.addf %72, %74 : vector<8x256xf32>
    %76 = vector.extract_strided_slice %2 {offsets = [56, 0], sizes = [8, 1], strides = [1, 1]} : vector<96x1xf32> to vector<8x1xf32>
    %77 = vector.broadcast %76 : vector<8x1xf32> to vector<8x256xf32>
    %78 = arith.addf %75, %77 : vector<8x256xf32>
    %cst_29 = arith.constant 5.000000e-01 : f32
    %79 = vector.broadcast %cst_29 : f32 to vector<8x256xf32>
    %80 = arith.mulf %79, %78 : vector<8x256xf32>
    %81 = math.tanh %80 : vector<8x256xf32>
    %cst_30 = arith.constant 5.000000e-01 : f32
    %82 = vector.broadcast %cst_30 : f32 to vector<8x256xf32>
    %83 = arith.mulf %82, %81 : vector<8x256xf32>
    %cst_31 = arith.constant 5.000000e-01 : f32
    %84 = vector.broadcast %cst_31 : f32 to vector<8x256xf32>
    %85 = arith.addf %83, %84 : vector<8x256xf32>
    %86 = arith.mulf %78, %85 : vector<8x256xf32>
    %87 = tpu.concatenate %17, %33, %86 in 0 : vector<32x256xf32>, vector<8x256xf32>, vector<8x256xf32> -> vector<48x256xf32>
    %c0_32 = arith.constant 0 : index
    %c0_33 = arith.constant 0 : index
    %88 = vector.load %arg6[%c0_32, %c0_33] : memref<32x48xbf16, #tpu.memory_space<vmem>>, vector<32x48xbf16>
    %89 = arith.truncf %87 : vector<48x256xf32> to vector<48x256xbf16>
    %cst_34 = arith.constant dense<0.000000e+00> : vector<32x256xf32>
    %90 = tpu.matmul %88, %89, %cst_34 {dimension_numbers = #tpu.dot_dimension_numbers<[1], [0], [0], [1], [0, 0, 1, 1], [], []>} : vector<32x48xbf16>, vector<48x256xbf16>, vector<32x256xf32> -> vector<32x256xf32>
    %91 = vector.extract_strided_slice %2 {offsets = [64, 0], sizes = [32, 1], strides = [1, 1]} : vector<96x1xf32> to vector<32x1xf32>
    %92 = vector.broadcast %91 : vector<32x1xf32> to vector<32x256xf32>
    %93 = arith.addf %90, %92 : vector<32x256xf32>
    %cst_35 = arith.constant 5.000000e-01 : f32
    %94 = vector.broadcast %cst_35 : f32 to vector<32x256xf32>
    %95 = arith.mulf %94, %93 : vector<32x256xf32>
    %96 = math.tanh %95 : vector<32x256xf32>
    %cst_36 = arith.constant 5.000000e-01 : f32
    %97 = vector.broadcast %cst_36 : f32 to vector<32x256xf32>
    %98 = arith.mulf %97, %96 : vector<32x256xf32>
    %cst_37 = arith.constant 5.000000e-01 : f32
    %99 = vector.broadcast %cst_37 : f32 to vector<32x256xf32>
    %100 = arith.addf %98, %99 : vector<32x256xf32>
    %101 = arith.mulf %93, %100 : vector<32x256xf32>
    %102 = arith.truncf %101 : vector<32x256xf32> to vector<32x256xbf16>
    %c0_38 = arith.constant 0 : index
    %c0_39 = arith.constant 0 : index
    %c0_40 = arith.constant 0 : index
    %103 = vector.load %arg9[%c0_38, %c0_39, %c0_40] : memref<1x32x256xbf16, #tpu.memory_space<vmem>>, vector<1x32x256xbf16>
    %104 = vector.shape_cast %103 : vector<1x32x256xbf16> to vector<32x256xbf16>
    %105 = vector.shape_cast %102 : vector<32x256xbf16> to vector<1x32x256xbf16>
    tpu.vector_store %arg9[%c0_38, %c0_39, %c0_40], %105 {strides = array<i32>} : memref<1x32x256xbf16, #tpu.memory_space<vmem>>, vector<1x32x256xbf16>,
    return
  }
  func.func @transform_0(%arg0: i32) -> (i32, i32, i32) {
    %c0_i32 = arith.constant 0 : i32
    %c0_i32_0 = arith.constant 0 : i32
    %c0_i32_1 = arith.constant 0 : i32
    return %arg0, %c0_i32, %c0_i32_0 : i32, i32, i32
  }
  func.func @transform_1(%arg0: i32) -> (i32, i32) {
    %c0_i32 = arith.constant 0 : i32
    %c0_i32_0 = arith.constant 0 : i32
    %c0_i32_1 = arith.constant 0 : i32
    return %c0_i32, %c0_i32_0 : i32, i32
  }
  func.func @transform_2(%arg0: i32) -> (i32, i32) {
    %c0_i32 = arith.constant 0 : i32
    %c0_i32_0 = arith.constant 0 : i32
    %c0_i32_1 = arith.constant 0 : i32
    return %c0_i32, %c0_i32_0 : i32, i32
  }
  func.func @transform_3(%arg0: i32) -> (i32, i32) {
    %c0_i32 = arith.constant 0 : i32
    %c0_i32_0 = arith.constant 0 : i32
    %c0_i32_1 = arith.constant 0 : i32
    return %c0_i32, %c0_i32_0 : i32, i32
  }
  func.func @transform_4(%arg0: i32) -> (i32, i32) {
    %c0_i32 = arith.constant 0 : i32
    %c0_i32_0 = arith.constant 0 : i32
    %c0_i32_1 = arith.constant 0 : i32
    return %c0_i32, %c0_i32_0 : i32, i32
  }
  func.func @transform_5(%arg0: i32) -> (i32, i32) {
    %c0_i32 = arith.constant 0 : i32
    %c0_i32_0 = arith.constant 0 : i32
    %c0_i32_1 = arith.constant 0 : i32
    return %c0_i32, %c0_i32_0 : i32, i32
  }
  func.func @transform_6(%arg0: i32) -> (i32, i32) {
    %c0_i32 = arith.constant 0 : i32
    %c0_i32_0 = arith.constant 0 : i32
    %c0_i32_1 = arith.constant 0 : i32
    return %c0_i32, %c0_i32_0 : i32, i32
  }
  func.func @transform_7(%arg0: i32) -> (i32, i32) {
    %c0_i32 = arith.constant 0 : i32
    %c0_i32_0 = arith.constant 0 : i32
    %c0_i32_1 = arith.constant 0 : i32
    return %c0_i32, %c0_i32_0 : i32, i32
  }
  func.func @transform_8(%arg0: i32) -> (i32, i32, i32) {
    %c0_i32 = arith.constant 0 : i32
    %c0_i32_0 = arith.constant 0 : i32
    %c0_i32_1 = arith.constant 0 : i32
    return %arg0, %c0_i32, %c0_i32_0 : i32, i32, i32
  }
}

</mosaic_0001>

<llo_original>
// kernel: tpu_custom_call.1
$region0: #{tpu_custom_call.1}
  #allocation0 [shape = 'u32[]', space=smem, size = 0x4, offset = 0x4, fixed_abs, tag = 'smem constant byte address 0x4 - core index']
  #allocation1 [shape = 'u32[144,128]{1,0:T(1,128)}', space=vmem, size = 0x12000, scoped, tag = 'internal scratch']
  %s0 = inlined_call_operand.vmem [shape: bf16[2,32,256], index: 0, kind: input, shape index: {}]
  %s1 = inlined_call_operand.vmem [shape: bf16[32,32], index: 1, kind: input, shape index: {}]
  %s2 = inlined_call_operand.vmem [shape: bf16[16,16], index: 2, kind: input, shape index: {}]
  %s3 = inlined_call_operand.vmem [shape: bf16[24,8], index: 3, kind: input, shape index: {}]
  %s4 = inlined_call_operand.vmem [shape: bf16[24,8], index: 4, kind: input, shape index: {}]
  %s5 = inlined_call_operand.vmem [shape: bf16[32,48], index: 5, kind: input, shape index: {}]
  %s6 = inlined_call_operand.vmem [shape: f32[96,1], index: 6, kind: input, shape index: {}]
  %s7 = inlined_call_operand.vmem [shape: f32[2,256], index: 7, kind: input, shape index: {}]
  %s8 = inlined_call_operand.hbm [shape: bf16[2,32,256], index: 8, kind: output, shape index: {}]
  %s9 = sld [smem:[#allocation0]]
  $region65: #{tpu_custom_call.1} parent=0
    _
  %s11 = ssub.s32 1, %s9
  %s12 = scalar_select 0, %s11, %s9
  $region1: #{tpu_custom_call.1} parent=0
    #allocation2 [shape = 'u8[32768]{0}', space=vmem, size = 0x8000, scoped, tag = 'output window, operand 0']
    #allocation3 [shape = 's32[2]{0}', space=sflag, size = 0x8, scoped, tag = 'scoped memory for tpu_custom_call.1']
    %13 = vsyncpa [#allocation3], 0
    %s14 = scalar_lea.sflag [#allocation3], 1
    %15 = vsyncpa %s14, 0
    loop: start=0, step=1, limit=4
    $region2: #{tpu_custom_call.1} parent=1 // loop_pre_header
      _
    $region3: #{tpu_custom_call.1} parent=1 // loop_header
      %s17 = sphi 0, %s21
      %p18 = scmp.ge.s32.totalorder %s17, 4
      %s27 = sphi 0, %s29
      %s30 = sphi 0, %s27
      %s31 = sphi 0, %s30
      %s47 = sphi 0, %s31
      %s51 = sphi 0, %s51
      %s53 = sphi 0, %s51
      %s54 = sphi 0, %s53
      %s68 = sphi 0, %s54
      %s72 = sphi 0, %s72
      %s74 = sphi 0, %s72
      %s75 = sphi 0, %s74
      %s89 = sphi 0, %s75
      %s93 = sphi 0, %s93
      %s95 = sphi 0, %s93
      %s96 = sphi 0, %s95
      %s110 = sphi 0, %s96
      %s114 = sphi 0, %s114
      %s116 = sphi 0, %s114
      %s117 = sphi 0, %s116
      %s131 = sphi 0, %s117
      %s135 = sphi 0, %s135
      %s137 = sphi 0, %s135
      %s138 = sphi 0, %s137
      %s152 = sphi 0, %s138
      %s156 = sphi 0, %s156
      %s158 = sphi 0, %s156
      %s159 = sphi 0, %s158
      %s173 = sphi 0, %s159
      %s177 = sphi 0, %s177
      %s179 = sphi 0, %s177
      %s180 = sphi 0, %s179
      %s194 = sphi 0, %s180
      %s200 = sphi 0, %s202
      %s203 = sphi 0, %s200
      %s204 = sphi 0, %s203
      %s220 = sphi 0, %s204
    $region4: #{tpu_custom_call.1} parent=1 // loop_header_branch
      %20 = sbr.rel (%p18) target = $region8
    $region5: #{tpu_custom_call.1} parent=1 // loop_body
      %s22 = ssub.s32 %s17, 1
      %s23 = ssub.s32 %s17, 2
      %s24 = sadd.s32 %s17, 1
      %s25 = ssub.s32 %s17, %s24
      %p26 = scmp.eq.s32.totalorder %s25, 0
      %s28 = sadd.s32 %s27, 1
      %s29 = scalar_select %p26, %s27, %s28
      %p32 = pneg %p26
      %p33 = scmp.eq.s32.totalorder %s17, 1
      %p34 = por %p32, %p33
      %p35 = scmp.ne.s32.totalorder %s27, %s30
      %p36 = scmp.eq.s32.totalorder %s17, 0
      %p37 = por %p35, %p36
      %p38 = scmp.ne.s32.totalorder %s27, %s30
      %p39 = scmp.eq.s32.totalorder %s22, 1
      %p40 = por %p38, %p39
      %p41 = scmp.ne.s32.totalorder %s30, %s31
      %p42 = scmp.eq.s32.totalorder %s22, 0
      %p43 = por %p41, %p42
      %p44 = scmp.ne.s32.totalorder %s30, %s31
      %p45 = scmp.eq.s32.totalorder %s23, 1
      %p46 = por %p44, %p45
      %p48 = scmp.ne.s32.totalorder %s31, %s47
      %p49 = scmp.eq.s32.totalorder %s23, 0
      %p50 = por %p48, %p49
      %s52 = sadd.s32 %s51, 1
      %p55 = scmp.eq.s32.totalorder %s17, 1
      %p56 = scmp.ne.s32.totalorder %s51, %s53
      %p57 = scmp.eq.s32.totalorder %s17, 0
      %p58 = por %p56, %p57
      %p59 = scmp.ne.s32.totalorder %s51, %s53
      %p60 = scmp.eq.s32.totalorder %s22, 1
      %p61 = por %p59, %p60
      %p62 = scmp.ne.s32.totalorder %s53, %s54
      %p63 = scmp.eq.s32.totalorder %s22, 0
      %p64 = por %p62, %p63
      %p65 = scmp.ne.s32.totalorder %s53, %s54
      %p66 = scmp.eq.s32.totalorder %s23, 1
      %p67 = por %p65, %p66
      %p69 = scmp.ne.s32.totalorder %s54, %s68
      %p70 = scmp.eq.s32.totalorder %s23, 0
      %p71 = por %p69, %p70
      %s73 = sadd.s32 %s72, 1
      %p76 = scmp.eq.s32.totalorder %s17, 1
      %p77 = scmp.ne.s32.totalorder %s72, %s74
      %p78 = scmp.eq.s32.totalorder %s17, 0
      %p79 = por %p77, %p78
      %p80 = scmp.ne.s32.totalorder %s72, %s74
      %p81 = scmp.eq.s32.totalorder %s22, 1
      %p82 = por %p80, %p81
      %p83 = scmp.ne.s32.totalorder %s74, %s75
      %p84 = scmp.eq.s32.totalorder %s22, 0
      %p85 = por %p83, %p84
      %p86 = scmp.ne.s32.totalorder %s74, %s75
      %p87 = scmp.eq.s32.totalorder %s23, 1
      %p88 = por %p86, %p87
      %p90 = scmp.ne.s32.totalorder %s75, %s89
      %p91 = scmp.eq.s32.totalorder %s23, 0
      %p92 = por %p90, %p91
      %s94 = sadd.s32 %s93, 1
      %p97 = scmp.eq.s32.totalorder %s17, 1
      %p98 = scmp.ne.s32.totalorder %s93, %s95
      %p99 = scmp.eq.s32.totalorder %s17, 0
      %p100 = por %p98, %p99
      %p101 = scmp.ne.s32.totalorder %s93, %s95
      %p102 = scmp.eq.s32.totalorder %s22, 1
      %p103 = por %p101, %p102
      %p104 = scmp.ne.s32.totalorder %s95, %s96
      %p105 = scmp.eq.s32.totalorder %s22, 0
      %p106 = por %p104, %p105
      %p107 = scmp.ne.s32.totalorder %s95, %s96
      %p108 = scmp.eq.s32.totalorder %s23, 1
      %p109 = por %p107, %p108
      %p111 = scmp.ne.s32.totalorder %s96, %s110
      %p112 = scmp.eq.s32.totalorder %s23, 0
      %p113 = por %p111, %p112
      %s115 = sadd.s32 %s114, 1
      %p118 = scmp.eq.s32.totalorder %s17, 1
      %p119 = scmp.ne.s32.totalorder %s114, %s116
      %p120 = scmp.eq.s32.totalorder %s17, 0
      %p121 = por %p119, %p120
      %p122 = scmp.ne.s32.totalorder %s114, %s116
      %p123 = scmp.eq.s32.totalorder %s22, 1
      %p124 = por %p122, %p123
      %p125 = scmp.ne.s32.totalorder %s116, %s117
      %p126 = scmp.eq.s32.totalorder %s22, 0
      %p127 = por %p125, %p126
      %p128 = scmp.ne.s32.totalorder %s116, %s117
      %p129 = scmp.eq.s32.totalorder %s23, 1
      %p130 = por %p128, %p129
      %p132 = scmp.ne.s32.totalorder %s117, %s131
      %p133 = scmp.eq.s32.totalorder %s23, 0
      %p134 = por %p132, %p133
      %s136 = sadd.s32 %s135, 1
      %p139 = scmp.eq.s32.totalorder %s17, 1
      %p140 = scmp.ne.s32.totalorder %s135, %s137
      %p141 = scmp.eq.s32.totalorder %s17, 0
      %p142 = por %p140, %p141
      %p143 = scmp.ne.s32.totalorder %s135, %s137
      %p144 = scmp.eq.s32.totalorder %s22, 1
      %p145 = por %p143, %p144
      %p146 = scmp.ne.s32.totalorder %s137, %s138
      %p147 = scmp.eq.s32.totalorder %s22, 0
      %p148 = por %p146, %p147
      %p149 = scmp.ne.s32.totalorder %s137, %s138
      %p150 = scmp.eq.s32.totalorder %s23, 1
      %p151 = por %p149, %p150
      %p153 = scmp.ne.s32.totalorder %s138, %s152
      %p154 = scmp.eq.s32.totalorder %s23, 0
      %p155 = por %p153, %p154
      %s157 = sadd.s32 %s156, 1
      %p160 = scmp.eq.s32.totalorder %s17, 1
      %p161 = scmp.ne.s32.totalorder %s156, %s158
      %p162 = scmp.eq.s32.totalorder %s17, 0
      %p163 = por %p161, %p162
      %p164 = scmp.ne.s32.totalorder %s156, %s158
      %p165 = scmp.eq.s32.totalorder %s22, 1
      %p166 = por %p164, %p165
      %p167 = scmp.ne.s32.totalorder %s158, %s159
      %p168 = scmp.eq.s32.totalorder %s22, 0
      %p169 = por %p167, %p168
      %p170 = scmp.ne.s32.totalorder %s158, %s159
      %p171 = scmp.eq.s32.totalorder %s23, 1
      %p172 = por %p170, %p171
      %p174 = scmp.ne.s32.totalorder %s159, %s173
      %p175 = scmp.eq.s32.totalorder %s23, 0
      %p176 = por %p174, %p175
      %s178 = sadd.s32 %s177, 1
      %p181 = scmp.eq.s32.totalorder %s17, 1
      %p182 = scmp.ne.s32.totalorder %s177, %s179
      %p183 = scmp.eq.s32.totalorder %s17, 0
      %p184 = por %p182, %p183
      %p185 = scmp.ne.s32.totalorder %s177, %s179
      %p186 = scmp.eq.s32.totalorder %s22, 1
      %p187 = por %p185, %p186
      %p188 = scmp.ne.s32.totalorder %s179, %s180
      %p189 = scmp.eq.s32.totalorder %s22, 0
      %p190 = por %p188, %p189
      %p191 = scmp.ne.s32.totalorder %s179, %s180
      %p192 = scmp.eq.s32.totalorder %s23, 1
      %p193 = por %p191, %p192
      %p195 = scmp.ne.s32.totalorder %s180, %s194
      %p196 = scmp.eq.s32.totalorder %s23, 0
      %p197 = por %p195, %p196
      %s198 = ssub.s32 %s17, %s24
      %p199 = scmp.eq.s32.totalorder %s198, 0
      %s201 = sadd.s32 %s200, 1
      %s202 = scalar_select %p199, %s200, %s201
      %p205 = pneg %p199
      %p206 = scmp.eq.s32.totalorder %s17, 1
      %p207 = por %p205, %p206
      %p208 = scmp.ne.s32.totalorder %s200, %s203
      %p209 = scmp.eq.s32.totalorder %s17, 0
      %p210 = por %p208, %p209
      %p211 = scmp.ne.s32.totalorder %s200, %s203
      %p212 = scmp.eq.s32.totalorder %s22, 1
      %p213 = por %p211, %p212
      %p214 = scmp.ne.s32.totalorder %s203, %s204
      %p215 = scmp.eq.s32.totalorder %s22, 0
      %p216 = por %p214, %p215
      %p217 = scmp.ne.s32.totalorder %s203, %s204
      %p218 = scmp.eq.s32.totalorder %s23, 1
      %p219 = por %p217, %p218
      %p221 = scmp.ne.s32.totalorder %s204, %s220
      %p222 = scmp.eq.s32.totalorder %s23, 0
      %p223 = por %p221, %p222
      %p224 = scmp.le.s32.totalorder 1, %s17
      %p225 = scmp.lt.s32.totalorder %s17, 3
      %p226 = pnand %p224, %p225
      %p227 = pneg %p226
      // Predicated region
      $region9: #{tpu_custom_call.1} parent=5 // pred_check
        _
      $region10: #{tpu_custom_call.1} parent=5 // pred_check_branch
        %229 = sbr.rel (%p226) target = $region12
      $region11: #{tpu_custom_call.1} parent=5 // pred_region
        %s230 = ssub.s32 %s17, 1
        // Predicated region
        $region13: #{tpu_custom_call.1} parent=11 // pred_check
          %p231 = pneg %p64
        $region14: #{tpu_custom_call.1} parent=11 // pred_check_branch
          %233 = sbr.rel (%p231) target = $region16
        $region15: #{tpu_custom_call.1} parent=11 // pred_region
          _
        $region16: #{tpu_custom_call.1} parent=11 // pred_fallthru
          _
        // Predicated region
        $region17: #{tpu_custom_call.1} parent=11 // pred_check
          %p234 = pneg %p85
        $region18: #{tpu_custom_call.1} parent=11 // pred_check_branch
          %236 = sbr.rel (%p234) target = $region20
        $region19: #{tpu_custom_call.1} parent=11 // pred_region
          _
        $region20: #{tpu_custom_call.1} parent=11 // pred_fallthru
          _
        // Predicated region
        $region21: #{tpu_custom_call.1} parent=11 // pred_check
          %p237 = pneg %p106
        $region22: #{tpu_custom_call.1} parent=11 // pred_check_branch
          %239 = sbr.rel (%p237) target = $region24
        $region23: #{tpu_custom_call.1} parent=11 // pred_region
          _
        $region24: #{tpu_custom_call.1} parent=11 // pred_fallthru
          _
        // Predicated region
        $region25: #{tpu_custom_call.1} parent=11 // pred_check
          %p240 = pneg %p127
        $region26: #{tpu_custom_call.1} parent=11 // pred_check_branch
          %242 = sbr.rel (%p240) target = $region28
        $region27: #{tpu_custom_call.1} parent=11 // pred_region
          _
        $region28: #{tpu_custom_call.1} parent=11 // pred_fallthru
          _
        // Predicated region
        $region29: #{tpu_custom_call.1} parent=11 // pred_check
          %p243 = pneg %p148
        $region30: #{tpu_custom_call.1} parent=11 // pred_check_branch
          %245 = sbr.rel (%p243) target = $region32
        $region31: #{tpu_custom_call.1} parent=11 // pred_region
          _
        $region32: #{tpu_custom_call.1} parent=11 // pred_fallthru
          _
        // Predicated region
        $region33: #{tpu_custom_call.1} parent=11 // pred_check
          %p246 = pneg %p169
        $region34: #{tpu_custom_call.1} parent=11 // pred_check_branch
          %248 = sbr.rel (%p246) target = $region36
        $region35: #{tpu_custom_call.1} parent=11 // pred_region
          _
        $region36: #{tpu_custom_call.1} parent=11 // pred_fallthru
          _
        // Predicated region
        $region37: #{tpu_custom_call.1} parent=11 // pred_check
          %p249 = pneg %p190
        $region38: #{tpu_custom_call.1} parent=11 // pred_check_branch
          %251 = sbr.rel (%p249) target = $region40
        $region39: #{tpu_custom_call.1} parent=11 // pred_region
          _
        $region40: #{tpu_custom_call.1} parent=11 // pred_fallthru
          _
      $region12: #{tpu_custom_call.1} parent=5 // pred_fallthru
        _
      %p252 = scmp.lt.s32.totalorder %s17, 2
      // Predicated region
      $region41: #{tpu_custom_call.1} parent=5 // pred_check
        %p253 = pneg %p252
      $region42: #{tpu_custom_call.1} parent=5 // pred_check_branch
        %255 = sbr.rel (%p253) target = $region44
      $region43: #{tpu_custom_call.1} parent=5 // pred_region
        // Predicated region
        $region45: #{tpu_custom_call.1} parent=43 // pred_check
          %p256 = pneg %p37
        $region46: #{tpu_custom_call.1} parent=43 // pred_check_branch
          %258 = sbr.rel (%p256) target = $region48
        $region47: #{tpu_custom_call.1} parent=43 // pred_region
          %p259 = scmp.lt.s32.totalorder %s17, 1
          %s260 = scalar_select %p259, %s17, 1
          %s261 = smul.addr %s260, 8
          %s262 = smul.addr %s261, 4
          %s263 = scalar_lea.vmem %s0, %s262
        $region48: #{tpu_custom_call.1} parent=43 // pred_fallthru
          _
      $region44: #{tpu_custom_call.1} parent=5 // pred_fallthru
        _
      %p264 = scmp.le.s32.totalorder 1, %s17
      %p265 = scmp.lt.s32.totalorder %s17, 3
      %p266 = pnand %p264, %p265
      %p267 = pneg %p266
      // Predicated region
      $region49: #{tpu_custom_call.1} parent=5 // pred_check
        _
      $region50: #{tpu_custom_call.1} parent=5 // pred_check_branch
        %269 = sbr.rel (%p266) target = $region52
      $region51: #{tpu_custom_call.1} parent=5 // pred_region
        %s270 = ssub.s32 %s17, 1
        %p271 = scmp.lt.s32.totalorder %s22, 1
        %s272 = scalar_select %p271, %s22, 1
        %s273 = smul.addr %s272, 8
        %s274 = smul.addr %s273, 4
        %s275 = scalar_lea.vmem %s0, %s274
        %p276 = pneg %p43
        %p277 = pneg %p40
        %p278 = pneg %p64
        %p279 = pneg %p61
        %p280 = pneg %p85
        %p281 = pneg %p82
        %p282 = pneg %p106
        %p283 = pneg %p103
        %p284 = pneg %p127
        %p285 = pneg %p124
        %p286 = pneg %p148
        %p287 = pneg %p145
        %p288 = pneg %p169
        %p289 = pneg %p166
        %p290 = pneg %p190
        %p291 = pneg %p187
        %p292 = pneg %p216
        %p293 = pneg %p213
        %s294 = sand.u32 %s203, 1
        %s295 = scalar_lea.sflag [#allocation3], %s294
        %s296 = sand.u32 %s203, 1
        %s297 = smul.addr %s296, 32
        %s298 = scalar_lea.vmem [#allocation2], %s297
        %p299 = scmp.lt.s32.totalorder %s22, 1
        %s300 = scalar_select %p299, %s22, 1
        %s301 = smul.addr %s300, 8
        %s302 = smul.addr %s301, 4
        %s303 = scalar_lea.vmem %s0, %s302
        %v305 = vld [vmem:[%s303] sm:$0xff]
        %v306 = vld [vmem:[%s303 + $0x8] sm:$0xff]
        %v307 = vld [vmem:[%s303 + $0x10] sm:$0xff]
        %v308 = vld [vmem:[%s303 + $0x18] sm:$0xff]
        %v309 = vld [vmem:[%s6] sm:$0xff]
        %v310 = vld [vmem:[%s6 + $0x8] sm:$0xff]
        %v311 = vld [vmem:[%s6 + $0x10] sm:$0xff]
        %v312 = vld [vmem:[%s6 + $0x18] sm:$0xff]
        %v313 = vld [vmem:[%s6 + $0x20] sm:$0xff]
        %v314 = vld [vmem:[%s6 + $0x28] sm:$0xff]
        %v315 = vld [vmem:[%s6 + $0x30] sm:$0xff]
        %v316 = vld [vmem:[%s6 + $0x38] sm:$0xff]
        %v317 = vld [vmem:[%s6 + $0x40] sm:$0xff]
        %v318 = vld [vmem:[%s6 + $0x48] sm:$0xff]
        %v319 = vld [vmem:[%s6 + $0x50] sm:$0xff]
        %v320 = vld [vmem:[%s6 + $0x58] sm:$0xff]
        %v321 = vld [vmem:[%s7] ss:$2 sm:$0x3]
        %s322 = scalar_lea.vmem %s7, 1
        %v323 = vld [vmem:[%s322] ss:$2 sm:$0x3]
        %v324 = vld [vmem:[%s1] sm:$0xf]
        %v325 = vld [vmem:[%s1 + $0x4] sm:$0xf]
        %v326 = vld [vmem:[%s1 + $0x8] sm:$0xf]
        %v327 = vld [vmem:[%s1 + $0xc] sm:$0xf]
        %329 = vset.pattern.permute.xlu0 0
        %330 = vperm.xlu0 %329, %v309
        %v331 = vpop.permute.xlu0 %330
        %334 = vset.pattern.permute.xlu0 0
        %335 = vperm.xlu0 %334, %v310
        %v336 = vpop.permute.xlu0 %335
        %339 = vset.pattern.permute.xlu0 0
        %340 = vperm.xlu0 %339, %v311
        %v341 = vpop.permute.xlu0 %340
        %344 = vset.pattern.permute.xlu0 0
        %345 = vperm.xlu0 %344, %v312
        %v346 = vpop.permute.xlu0 %345
        %v352 = vunpack.c.l.b16 %v324
        %v353 = vunpack.c.l.b16 %v325
        %v354 = vunpack.c.l.b16 %v326
        %v355 = vunpack.c.l.b16 %v327
        %v356 = vpack.c.b16 %v353, %v352
        %v357 = vpack.c.b16 %v355, %v354
        %v362 = vunpack.c.l.b16 %v305
        %v363 = vunpack.c.h.b16 %v305
        %v364 = vunpack.c.l.b16 %v306
        %v365 = vunpack.c.h.b16 %v306
        %v366 = vunpack.c.l.b16 %v307
        %v367 = vunpack.c.h.b16 %v307
        %v368 = vunpack.c.l.b16 %v308
        %v369 = vunpack.c.h.b16 %v308
        %v370 = vpack.c.b16 %v364, %v362
        %v371 = vpack.c.b16 %v365, %v363
        %v372 = vpack.c.b16 %v368, %v366
        %v373 = vpack.c.b16 %v369, %v367
        %vm378 = vcmask 261120
        %v380 = vsel %vm378, %v356, 0
        %v383 = vsel %vm378, %v357, 0
        %385 = vmatprep.subr.bf16.mxu0 0
        %386 = vmatpush1.bf16.msra.mxu0 0
        %387 = vmatprep.subr.bf16.mxu0 0
        %388 = vmatpush1.bf16.msra.mxu0 0
        %389 = vmatprep.subr.bf16.mxu0 0
        %390 = vmatpush1.bf16.msra.mxu0 0
        %391 = vmatprep.subr.bf16.mxu0 0
        %392 = vmatpush1.bf16.msra.mxu0 0
        %393 = vmatprep.subr.bf16.mxu0 0
        %394 = vmatpush1.bf16.msra.mxu0 0
        %395 = vmatprep.subr.bf16.mxu0 0
        %396 = vmatpush1.bf16.msra.mxu0 0
        %397 = vmatprep.subr.bf16.mxu0 %v373
        %398 = vmatpush1.bf16.msra.mxu0 %v372
        %399 = vmatprep.subr.bf16.mxu0 %v371
        %400 = vmatpush1.bf16.msra.mxu0 %v370
        %401 = vmatprep.subr.bf16.mxu0 0
        %402 = vmatpush2.bf16.msra.mxu0 0
        %403 = vmatprep.subr.bf16.mxu0 0
        %404 = vmatpush2.bf16.msra.mxu0 0
        %405 = vmatprep.subr.bf16.mxu0 0
        %406 = vmatpush2.bf16.msra.mxu0 0
        %407 = vmatprep.subr.bf16.mxu0 0
        %408 = vmatpush2.bf16.msra.mxu0 0
        %409 = vmatprep.subr.bf16.mxu0 0
        %410 = vmatpush2.bf16.msra.mxu0 0
        %411 = vmatprep.subr.bf16.mxu0 0
        %412 = vmatpush2.bf16.msra.mxu0 0
        %413 = vmatprep.subr.bf16.mxu0 0
        %414 = vmatpush2.bf16.msra.mxu0 0
        %415 = vmatprep.subr.bf16.mxu0 0
        %416 = vmatpush2.bf16.msra.mxu0 0
        %417 = vmatprep.mubr.bf16.mxu0 0
        %418 = vmatmul.mubr.bf16.gmra.mxu0 %v380
        %v419 = vpop.f32.mrf.mxu0
        %v420 = vadd.f32 %v331, %v419
        %v421 = vpop.f32.mrf.mxu0
        %v422 = vadd.f32 %v331, %v421
        %v423 = vpop.f32.mrf.mxu0
        %v424 = vadd.f32 %v336, %v423
        %v425 = vpop.f32.mrf.mxu0
        %v426 = vadd.f32 %v336, %v425
        %427 = vmatprep.mubr.bf16.mxu0 0
        %428 = vmatmul.mubr.bf16.gmra.mxu0 %v383
        %v429 = vpop.f32.mrf.mxu0
        %v430 = vadd.f32 %v341, %v429
        %v431 = vpop.f32.mrf.mxu0
        %v432 = vadd.f32 %v341, %v431
        %v433 = vpop.f32.mrf.mxu0
        %v434 = vadd.f32 %v346, %v433
        %v435 = vpop.f32.mrf.mxu0
        %v436 = vadd.f32 %v346, %v435
        %437 = vdwg.mxu0
        %v438 = vmul.f32 %v420, 0.5
        %v439 = vmul.f32 %v422, 0.5
        %v440 = vmul.f32 %v424, 0.5
        %v441 = vmul.f32 %v426, 0.5
        %v442 = vmul.f32 %v430, 0.5
        %v443 = vmul.f32 %v432, 0.5
        %v444 = vmul.f32 %v434, 0.5
        %v445 = vmul.f32 %v436, 0.5
        %v446 = vtanh.pop %v438
        %v447 = vtanh.pop %v439
        %v448 = vtanh.pop %v440
        %v449 = vtanh.pop %v441
        %v450 = vtanh.pop %v442
        %v451 = vtanh.pop %v443
        %v452 = vtanh.pop %v444
        %v453 = vtanh.pop %v445
        %v454 = vmul.f32 %v446, 0.5
        %v455 = vmul.f32 %v447, 0.5
        %v456 = vmul.f32 %v448, 0.5
        %v457 = vmul.f32 %v449, 0.5
        %v458 = vmul.f32 %v450, 0.5
        %v459 = vmul.f32 %v451, 0.5
        %v460 = vmul.f32 %v452, 0.5
        %v461 = vmul.f32 %v453, 0.5
        %v462 = vadd.f32 %v454, 0.5
        %v463 = vadd.f32 %v455, 0.5
        %v464 = vadd.f32 %v456, 0.5
        %v465 = vadd.f32 %v457, 0.5
        %v466 = vadd.f32 %v458, 0.5
        %v467 = vadd.f32 %v459, 0.5
        %v468 = vadd.f32 %v460, 0.5
        %v469 = vadd.f32 %v461, 0.5
        %v470 = vmul.f32 %v420, %v462
        %v471 = vmul.f32 %v422, %v463
        %v472 = vmul.f32 %v424, %v464
        %v473 = vmul.f32 %v426, %v465
        %v474 = vmul.f32 %v430, %v466
        %v475 = vmul.f32 %v432, %v467
        %v476 = vmul.f32 %v434, %v468
        %v477 = vmul.f32 %v436, %v469
        %v478 = vld [vmem:[%s2] sm:$0xf]
        %v479 = vld [vmem:[%s2 + $0x4] sm:$0xf]
        %v480 = vpack.c.bf16 %v476, %v474
        %v481 = vpack.c.bf16 %v477, %v475
        %483 = vset.pattern.permute.xlu0 0
        %484 = vperm.xlu0 %483, %v313
        %v485 = vpop.permute.xlu0 %484
        %488 = vset.pattern.permute.xlu0 0
        %489 = vperm.xlu0 %488, %v314
        %v490 = vpop.permute.xlu0 %489
        %v494 = vunpack.c.l.b16 %v478
        %v495 = vunpack.c.l.b16 %v479
        %v496 = vpack.c.b16 %v495, %v494
        %vm497 = vcmask 130048
        %v499 = vsel %vm497, %v496, 0
        %501 = vmatprep.subr.bf16.mxu0 0
        %502 = vmatpush1.bf16.msra.mxu0 0
        %503 = vmatprep.subr.bf16.mxu0 0
        %504 = vmatpush1.bf16.msra.mxu0 0
        %505 = vmatprep.subr.bf16.mxu0 0
        %506 = vmatpush1.bf16.msra.mxu0 0
        %507 = vmatprep.subr.bf16.mxu0 0
        %508 = vmatpush1.bf16.msra.mxu0 0
        %509 = vmatprep.subr.bf16.mxu0 0
        %510 = vmatpush1.bf16.msra.mxu0 0
        %511 = vmatprep.subr.bf16.mxu0 0
        %512 = vmatpush1.bf16.msra.mxu0 0
        %513 = vmatprep.subr.bf16.mxu0 0
        %514 = vmatpush1.bf16.msra.mxu0 0
        %515 = vmatprep.subr.bf16.mxu0 %v481
        %516 = vmatpush1.bf16.msra.mxu0 %v480
        %517 = vmatprep.subr.bf16.mxu0 0
        %518 = vmatpush2.bf16.msra.mxu0 0
        %519 = vmatprep.subr.bf16.mxu0 0
        %520 = vmatpush2.bf16.msra.mxu0 0
        %521 = vmatprep.subr.bf16.mxu0 0
        %522 = vmatpush2.bf16.msra.mxu0 0
        %523 = vmatprep.subr.bf16.mxu0 0
        %524 = vmatpush2.bf16.msra.mxu0 0
        %525 = vmatprep.subr.bf16.mxu0 0
        %526 = vmatpush2.bf16.msra.mxu0 0
        %527 = vmatprep.subr.bf16.mxu0 0
        %528 = vmatpush2.bf16.msra.mxu0 0
        %529 = vmatprep.subr.bf16.mxu0 0
        %530 = vmatpush2.bf16.msra.mxu0 0
        %531 = vmatprep.subr.bf16.mxu0 0
        %532 = vmatpush2.bf16.msra.mxu0 0
        %533 = vmatprep.mubr.bf16.mxu0 0
        %534 = vmatmul.mubr.bf16.gmra.mxu0 %v499
        %v535 = vpop.f32.mrf.mxu0
        %v536 = vadd.f32 %v485, %v535
        %v537 = vpop.f32.mrf.mxu0
        %v538 = vadd.f32 %v485, %v537
        %v539 = vpop.f32.mrf.mxu0
        %v540 = vadd.f32 %v490, %v539
        %v541 = vpop.f32.mrf.mxu0
        %v542 = vadd.f32 %v490, %v541
        %543 = vdwg.mxu0
        %v544 = vmul.f32 %v536, 0.5
        %v545 = vmul.f32 %v538, 0.5
        %v546 = vmul.f32 %v540, 0.5
        %v547 = vmul.f32 %v542, 0.5
        %v548 = vtanh.pop %v544
        %v549 = vtanh.pop %v545
        %v550 = vtanh.pop %v546
        %v551 = vtanh.pop %v547
        %v552 = vmul.f32 %v548, 0.5
        %v553 = vmul.f32 %v549, 0.5
        %v554 = vmul.f32 %v550, 0.5
        %v555 = vmul.f32 %v551, 0.5
        %v556 = vadd.f32 %v552, 0.5
        %v557 = vadd.f32 %v553, 0.5
        %v558 = vadd.f32 %v554, 0.5
        %v559 = vadd.f32 %v555, 0.5
        %v560 = vmul.f32 %v536, %v556
        %v561 = vmul.f32 %v538, %v557
        %v562 = vmul.f32 %v540, %v558
        %v563 = vmul.f32 %v542, %v559
        %v564 = vld [vmem:[%s3] sm:$0xf]
        %v565 = vld [vmem:[%s3 + $0x4] sm:$0xf]
        %v566 = vld [vmem:[%s3 + $0x8] sm:$0xf]
        %v567 = vpack.c.bf16 %v562, %v562
        %v568 = vpack.c.bf16 %v563, %v563
        %v572 = vunpack.c.l.b16 %v564
        %v573 = vunpack.c.l.b16 %v565
        %v574 = vunpack.c.l.b16 %v566
        %v575 = vpack.c.b16 %v573, %v572
        %v576 = vpack.c.b16 %v574, %v574
        %vm577 = vcmask 64512
        %v579 = vsel %vm577, %v575, 0
        %v582 = vsel %vm577, %v576, 0
        %vm584 = vcmask 1043456
        %v586 = vsel %vm584, %v567, 0
        %v589 = vsel %vm584, %v568, 0
        %591 = vmatprep.subr.bf16.mxu0 0
        %592 = vmatpush1.bf16.msra.mxu0 0
        %593 = vmatprep.subr.bf16.mxu0 0
        %594 = vmatpush1.bf16.msra.mxu0 0
        %595 = vmatprep.subr.bf16.mxu0 0
        %596 = vmatpush1.bf16.msra.mxu0 0
        %597 = vmatprep.subr.bf16.mxu0 0
        %598 = vmatpush1.bf16.msra.mxu0 0
        %599 = vmatprep.subr.bf16.mxu0 0
        %600 = vmatpush1.bf16.msra.mxu0 0
        %601 = vmatprep.subr.bf16.mxu0 0
        %602 = vmatpush1.bf16.msra.mxu0 0
        %603 = vmatprep.subr.bf16.mxu0 0
        %604 = vmatpush1.bf16.msra.mxu0 0
        %605 = vmatprep.subr.bf16.mxu0 %v589
        %606 = vmatpush1.bf16.msra.mxu0 %v586
        %607 = vmatprep.subr.bf16.mxu0 0
        %608 = vmatpush2.bf16.msra.mxu0 0
        %609 = vmatprep.subr.bf16.mxu0 0
        %610 = vmatpush2.bf16.msra.mxu0 0
        %611 = vmatprep.subr.bf16.mxu0 0
        %612 = vmatpush2.bf16.msra.mxu0 0
        %613 = vmatprep.subr.bf16.mxu0 0
        %614 = vmatpush2.bf16.msra.mxu0 0
        %615 = vmatprep.subr.bf16.mxu0 0
        %616 = vmatpush2.bf16.msra.mxu0 0
        %617 = vmatprep.subr.bf16.mxu0 0
        %618 = vmatpush2.bf16.msra.mxu0 0
        %619 = vmatprep.subr.bf16.mxu0 0
        %620 = vmatpush2.bf16.msra.mxu0 0
        %621 = vmatprep.subr.bf16.mxu0 0
        %622 = vmatpush2.bf16.msra.mxu0 0
        %623 = vmatprep.mubr.bf16.mxu0 0
        %624 = vmatmul.mubr.bf16.gmra.mxu0 %v579
        %v625 = vpop.f32.mrf.mxu0
        %v626 = vadd.f32 0.0, %v625
        %v627 = vpop.f32.mrf.mxu0
        %v628 = vadd.f32 0.0, %v627
        %v629 = vpop.f32.mrf.mxu0
        %v630 = vadd.f32 0.0, %v629
        %v631 = vpop.f32.mrf.mxu0
        %v632 = vadd.f32 0.0, %v631
        %633 = vmatprep.mubr.bf16.mxu0 0
        %634 = vmatmul.mubr.bf16.gmra.mxu0 %v582
        %v635 = vpop.f32.mrf.mxu0
        %v636 = vadd.f32 0.0, %v635
        %v637 = vpop.f32.mrf.mxu0
        %v638 = vadd.f32 0.0, %v637
        %v639 = vpop.f32.mrf.mxu0
        %v640 = vpop.f32.mrf.mxu0
        %641 = vdwg.mxu0
        %644 = vrot.lane.b32.xlu0 %v626, 1
        %v645 = vpop.permute.xlu0 %644
        %646 = vrot.lane.b32.xlu0 %v628, 1
        %v647 = vpop.permute.xlu0 %646
        %vm648 = vcmask 7168
        %v649 = vsel %vm648, %v645, %v647
        %v652 = vsel %vm648, 0.0, %v645
        %v654 = vlaneseq
        %v655 = vshrl.u32 %v654, 7
        %v656 = vsub.s32 0, %v655
        %v657 = vrot.slane %v321, %v656
        %v658 = vlaneseq
        %v659 = vshrl.u32 %v658, 7
        %v660 = vsub.s32 1, %v659
        %v661 = vrot.slane %v321, %v660
        %v664 = vmul.f32 %v652, %v657
        %v665 = vmul.f32 %v649, %v661
        %v666 = vadd.f32 %v630, %v664
        %v667 = vadd.f32 %v632, %v665
        %670 = vrot.lane.b32.xlu0 %v636, 127
        %v671 = vpop.permute.xlu0 %670
        %672 = vrot.lane.b32.xlu0 %v638, 127
        %v673 = vpop.permute.xlu0 %672
        %vm674 = vcmask 1039360
        %v675 = vsel %vm674, %v671, %v673
        %v678 = vsel %vm674, %v673, 0.0
        %v680 = vlaneseq
        %v681 = vshrl.u32 %v680, 7
        %v682 = vsub.s32 0, %v681
        %v683 = vrot.slane %v323, %v682
        %v684 = vlaneseq
        %v685 = vshrl.u32 %v684, 7
        %v686 = vsub.s32 1, %v685
        %v687 = vrot.slane %v323, %v686
        %v690 = vmul.f32 %v675, %v683
        %v691 = vmul.f32 %v678, %v687
        %v692 = vadd.f32 %v666, %v690
        %v693 = vadd.f32 %v667, %v691
        %695 = vset.pattern.permute.xlu0 0
        %696 = vperm.xlu0 %695, %v315
        %v697 = vpop.permute.xlu0 %696
        %v699 = vadd.f32 %v692, %v697
        %v700 = vadd.f32 %v693, %v697
        %v701 = vmul.f32 %v699, 0.5
        %v702 = vmul.f32 %v700, 0.5
        %v703 = vtanh.pop %v701
        %v704 = vtanh.pop %v702
        %v705 = vmul.f32 %v703, 0.5
        %v706 = vmul.f32 %v704, 0.5
        %v707 = vadd.f32 %v705, 0.5
        %v708 = vadd.f32 %v706, 0.5
        %v709 = vmul.f32 %v699, %v707
        %v710 = vmul.f32 %v700, %v708
        %v711 = vld [vmem:[%s4] sm:$0xf]
        %v712 = vld [vmem:[%s4 + $0x4] sm:$0xf]
        %v713 = vld [vmem:[%s4 + $0x8] sm:$0xf]
        %v714 = vpack.c.bf16 %v709, %v709
        %v715 = vpack.c.bf16 %v710, %v710
        %v719 = vunpack.c.l.b16 %v711
        %v720 = vunpack.c.l.b16 %v712
        %v721 = vunpack.c.l.b16 %v713
        %v722 = vpack.c.b16 %v720, %v719
        %v723 = vpack.c.b16 %v721, %v721
        %v725 = vsel %vm577, %v722, 0
        %v728 = vsel %vm577, %v723, 0
        %v731 = vsel %vm584, %v714, 0
        %v734 = vsel %vm584, %v715, 0
        %736 = vmatprep.subr.bf16.mxu0 0
        %737 = vmatpush1.bf16.msra.mxu0 0
        %738 = vmatprep.subr.bf16.mxu0 0
        %739 = vmatpush1.bf16.msra.mxu0 0
        %740 = vmatprep.subr.bf16.mxu0 0
        %741 = vmatpush1.bf16.msra.mxu0 0
        %742 = vmatprep.subr.bf16.mxu0 0
        %743 = vmatpush1.bf16.msra.mxu0 0
        %744 = vmatprep.subr.bf16.mxu0 0
        %745 = vmatpush1.bf16.msra.mxu0 0
        %746 = vmatprep.subr.bf16.mxu0 0
        %747 = vmatpush1.bf16.msra.mxu0 0
        %748 = vmatprep.subr.bf16.mxu0 0
        %749 = vmatpush1.bf16.msra.mxu0 0
        %750 = vmatprep.subr.bf16.mxu0 %v734
        %751 = vmatpush1.bf16.msra.mxu0 %v731
        %752 = vmatprep.subr.bf16.mxu0 0
        %753 = vmatpush2.bf16.msra.mxu0 0
        %754 = vmatprep.subr.bf16.mxu0 0
        %755 = vmatpush2.bf16.msra.mxu0 0
        %756 = vmatprep.subr.bf16.mxu0 0
        %757 = vmatpush2.bf16.msra.mxu0 0
        %758 = vmatprep.subr.bf16.mxu0 0
        %759 = vmatpush2.bf16.msra.mxu0 0
        %760 = vmatprep.subr.bf16.mxu0 0
        %761 = vmatpush2.bf16.msra.mxu0 0
        %762 = vmatprep.subr.bf16.mxu0 0
        %763 = vmatpush2.bf16.msra.mxu0 0
        %764 = vmatprep.subr.bf16.mxu0 0
        %765 = vmatpush2.bf16.msra.mxu0 0
        %766 = vmatprep.subr.bf16.mxu0 0
        %767 = vmatpush2.bf16.msra.mxu0 0
        %768 = vmatprep.mubr.bf16.mxu0 0
        %769 = vmatmul.mubr.bf16.gmra.mxu0 %v725
        %v770 = vpop.f32.mrf.mxu0
        %v771 = vadd.f32 0.0, %v770
        %v772 = vpop.f32.mrf.mxu0
        %v773 = vadd.f32 0.0, %v772
        %v774 = vpop.f32.mrf.mxu0
        %v775 = vadd.f32 0.0, %v774
        %v776 = vpop.f32.mrf.mxu0
        %v777 = vadd.f32 0.0, %v776
        %778 = vmatprep.mubr.bf16.mxu0 0
        %779 = vmatmul.mubr.bf16.gmra.mxu0 %v728
        %v780 = vpop.f32.mrf.mxu0
        %v781 = vadd.f32 0.0, %v780
        %v782 = vpop.f32.mrf.mxu0
        %v783 = vadd.f32 0.0, %v782
        %v784 = vpop.f32.mrf.mxu0
        %v785 = vpop.f32.mrf.mxu0
        %786 = vdwg.mxu0
        %789 = vrot.lane.b32.xlu0 %v771, 16
        %v790 = vpop.permute.xlu0 %789
        %791 = vrot.lane.b32.xlu0 %v773, 16
        %v792 = vpop.permute.xlu0 %791
        %v793 = vsel %vm497, %v790, %v792
        %v796 = vsel %vm497, 0.0, %v790
        %v797 = vadd.f32 %v775, %v796
        %v798 = vadd.f32 %v777, %v793
        %801 = vrot.lane.b32.xlu0 %v781, 112
        %v802 = vpop.permute.xlu0 %801
        %803 = vrot.lane.b32.xlu0 %v783, 112
        %v804 = vpop.permute.xlu0 %803
        %vm805 = vcmask 916480
        %v806 = vsel %vm805, %v802, %v804
        %v809 = vsel %vm805, %v804, 0.0
        %v810 = vadd.f32 %v797, %v806
        %v811 = vadd.f32 %v798, %v809
        %813 = vset.pattern.permute.xlu0 0
        %814 = vperm.xlu0 %813, %v316
        %v815 = vpop.permute.xlu0 %814
        %v817 = vadd.f32 %v810, %v815
        %v818 = vadd.f32 %v811, %v815
        %v819 = vmul.f32 %v817, 0.5
        %v820 = vmul.f32 %v818, 0.5
        %v821 = vtanh.pop %v819
        %v822 = vtanh.pop %v820
        %v823 = vmul.f32 %v821, 0.5
        %v824 = vmul.f32 %v822, 0.5
        %v825 = vadd.f32 %v823, 0.5
        %v826 = vadd.f32 %v824, 0.5
        %v827 = vmul.f32 %v817, %v825
        %v828 = vmul.f32 %v818, %v826
        %v829 = vld [vmem:[%s5] sm:$0xf]
        %v830 = vld [vmem:[%s5 + $0x4] sm:$0xf]
        %v831 = vld [vmem:[%s5 + $0x8] sm:$0xf]
        %v832 = vld [vmem:[%s5 + $0xc] sm:$0xf]
        %v833 = vpack.c.bf16 %v472, %v470
        %v834 = vpack.c.bf16 %v473, %v471
        %v835 = vpack.c.bf16 %v827, %v560
        %v836 = vpack.c.bf16 %v828, %v561
        %838 = vset.pattern.permute.xlu0 0
        %839 = vperm.xlu0 %838, %v317
        %v840 = vpop.permute.xlu0 %839
        %843 = vset.pattern.permute.xlu0 0
        %844 = vperm.xlu0 %843, %v318
        %v845 = vpop.permute.xlu0 %844
        %848 = vset.pattern.permute.xlu0 0
        %849 = vperm.xlu0 %848, %v319
        %v850 = vpop.permute.xlu0 %849
        %853 = vset.pattern.permute.xlu0 0
        %854 = vperm.xlu0 %853, %v320
        %v855 = vpop.permute.xlu0 %854
        %v861 = vunpack.c.l.b16 %v829
        %v862 = vunpack.c.l.b16 %v830
        %v863 = vunpack.c.l.b16 %v831
        %v864 = vunpack.c.l.b16 %v832
        %v865 = vpack.c.b16 %v862, %v861
        %v866 = vpack.c.b16 %v864, %v863
        %vm867 = vcmask 392192
        %v869 = vsel %vm867, %v865, 0
        %v872 = vsel %vm867, %v866, 0
        %874 = vmatprep.subr.bf16.mxu0 0
        %875 = vmatpush1.bf16.msra.mxu0 0
        %876 = vmatprep.subr.bf16.mxu0 0
        %877 = vmatpush1.bf16.msra.mxu0 0
        %878 = vmatprep.subr.bf16.mxu0 0
        %879 = vmatpush1.bf16.msra.mxu0 0
        %880 = vmatprep.subr.bf16.mxu0 0
        %881 = vmatpush1.bf16.msra.mxu0 0
        %882 = vmatprep.subr.bf16.mxu0 0
        %883 = vmatpush1.bf16.msra.mxu0 0
        %884 = vmatprep.subr.bf16.mxu0 %v836
        %885 = vmatpush1.bf16.msra.mxu0 %v835
        %886 = vmatprep.subr.bf16.mxu0 %v481
        %887 = vmatpush1.bf16.msra.mxu0 %v480
        %888 = vmatprep.subr.bf16.mxu0 %v834
        %889 = vmatpush1.bf16.msra.mxu0 %v833
        %890 = vmatprep.subr.bf16.mxu0 0
        %891 = vmatpush2.bf16.msra.mxu0 0
        %892 = vmatprep.subr.bf16.mxu0 0
        %893 = vmatpush2.bf16.msra.mxu0 0
        %894 = vmatprep.subr.bf16.mxu0 0
        %895 = vmatpush2.bf16.msra.mxu0 0
        %896 = vmatprep.subr.bf16.mxu0 0
        %897 = vmatpush2.bf16.msra.mxu0 0
        %898 = vmatprep.subr.bf16.mxu0 0
        %899 = vmatpush2.bf16.msra.mxu0 0
        %900 = vmatprep.subr.bf16.mxu0 0
        %901 = vmatpush2.bf16.msra.mxu0 0
        %902 = vmatprep.subr.bf16.mxu0 0
        %903 = vmatpush2.bf16.msra.mxu0 0
        %904 = vmatprep.subr.bf16.mxu0 0
        %905 = vmatpush2.bf16.msra.mxu0 0
        %906 = vmatprep.mubr.bf16.mxu0 0
        %907 = vmatmul.mubr.bf16.gmra.mxu0 %v869
        %v908 = vpop.f32.mrf.mxu0
        %v909 = vadd.f32 %v840, %v908
        %v910 = vpop.f32.mrf.mxu0
        %v911 = vadd.f32 %v840, %v910
        %v912 = vpop.f32.mrf.mxu0
        %v913 = vadd.f32 %v845, %v912
        %v914 = vpop.f32.mrf.mxu0
        %v915 = vadd.f32 %v845, %v914
        %916 = vmatprep.mubr.bf16.mxu0 0
        %917 = vmatmul.mubr.bf16.gmra.mxu0 %v872
        %v918 = vpop.f32.mrf.mxu0
        %v919 = vadd.f32 %v850, %v918
        %v920 = vpop.f32.mrf.mxu0
        %v921 = vadd.f32 %v850, %v920
        %v922 = vpop.f32.mrf.mxu0
        %v923 = vadd.f32 %v855, %v922
        %v924 = vpop.f32.mrf.mxu0
        %v925 = vadd.f32 %v855, %v924
        %926 = vdwg.mxu0
        %v927 = vmul.f32 %v909, 0.5
        %v928 = vmul.f32 %v911, 0.5
        %v929 = vmul.f32 %v913, 0.5
        %v930 = vmul.f32 %v915, 0.5
        %v931 = vmul.f32 %v919, 0.5
        %v932 = vmul.f32 %v921, 0.5
        %v933 = vmul.f32 %v923, 0.5
        %v934 = vmul.f32 %v925, 0.5
        %v935 = vtanh.pop %v927
        %v936 = vtanh.pop %v928
        %v937 = vtanh.pop %v929
        %v938 = vtanh.pop %v930
        %v939 = vtanh.pop %v931
        %v940 = vtanh.pop %v932
        %v941 = vtanh.pop %v933
        %v942 = vtanh.pop %v934
        %v943 = vmul.f32 %v935, 0.5
        %v944 = vmul.f32 %v936, 0.5
        %v945 = vmul.f32 %v937, 0.5
        %v946 = vmul.f32 %v938, 0.5
        %v947 = vmul.f32 %v939, 0.5
        %v948 = vmul.f32 %v940, 0.5
        %v949 = vmul.f32 %v941, 0.5
        %v950 = vmul.f32 %v942, 0.5
        %v951 = vadd.f32 %v943, 0.5
        %v952 = vadd.f32 %v944, 0.5
        %v953 = vadd.f32 %v945, 0.5
        %v954 = vadd.f32 %v946, 0.5
        %v955 = vadd.f32 %v947, 0.5
        %v956 = vadd.f32 %v948, 0.5
        %v957 = vadd.f32 %v949, 0.5
        %v958 = vadd.f32 %v950, 0.5
        %v959 = vmul.f32 %v909, %v951
        %v960 = vmul.f32 %v911, %v952
        %v961 = vmul.f32 %v913, %v953
        %v962 = vmul.f32 %v915, %v954
        %v963 = vmul.f32 %v919, %v955
        %v964 = vmul.f32 %v921, %v956
        %v965 = vmul.f32 %v923, %v957
        %v966 = vmul.f32 %v925, %v958
        %v967 = vpack.c.bf16 %v961, %v959
        %v968 = vpack.c.bf16 %v962, %v960
        %v969 = vpack.c.bf16 %v965, %v963
        %v970 = vpack.c.bf16 %v966, %v964
        %v975 = vunpack.c.l.b16 %v967
        %v976 = vunpack.c.l.b16 %v968
        %v977 = vunpack.c.h.b16 %v967
        %v978 = vunpack.c.h.b16 %v968
        %v979 = vunpack.c.l.b16 %v969
        %v980 = vunpack.c.l.b16 %v970
        %v981 = vunpack.c.h.b16 %v969
        %v982 = vunpack.c.h.b16 %v970
        %v983 = vpack.c.b16 %v976, %v975
        %v984 = vpack.c.b16 %v978, %v977
        %v985 = vpack.c.b16 %v980, %v979
        %v986 = vpack.c.b16 %v982, %v981
        %991 = vst [vmem:[%s298] sm:$0xff] %v983
        %992 = vst [vmem:[%s298 + $0x8] sm:$0xff] %v984
        %993 = vst [vmem:[%s298 + $0x10] sm:$0xff] %v985
        %994 = vst [vmem:[%s298 + $0x18] sm:$0xff] %v986
        %s995 = sand.u32 %s203, 1
        %s996 = scalar_lea.sflag [#allocation3], %s995
        %s997 = sand.u32 %s203, 1
        %s998 = smul.addr %s997, 32
        %s999 = scalar_lea.vmem [#allocation2], %s998
        // Predicated region
        $region53: #{tpu_custom_call.1} parent=51 // pred_check
          %p1000 = pneg %p213
        $region54: #{tpu_custom_call.1} parent=51 // pred_check_branch
          %1002 = sbr.rel (%p1000) target = $region56
        $region55: #{tpu_custom_call.1} parent=51 // pred_region
          %s1004 = ssub.s32 512, 512
          %1005 = vsyncadd %s996, %s1004
          %s1006 = smul.addr %s22, 8
          %s1007 = smul.addr %s1006, 64
          %s1008 = scalar_lea.hbm %s8, %s1007
          %s1009 = sshll.u32 %s999, 4
          %s1010 = int_to_ptr.vmem [resolvable:$true] %s1009
          %1015 = dma.vmem_to_hbm [thread:$0]  %s1010, 512, %s1008, %s996, 128, 128, 8
        $region56: #{tpu_custom_call.1} parent=51 // pred_fallthru
          _
      $region52: #{tpu_custom_call.1} parent=5 // pred_fallthru
        _
      %p1016 = scmp.le.s32.totalorder 2, %s17
      // Predicated region
      $region57: #{tpu_custom_call.1} parent=5 // pred_check
        %p1017 = pneg %p1016
      $region58: #{tpu_custom_call.1} parent=5 // pred_check_branch
        %1019 = sbr.rel (%p1017) target = $region60
      $region59: #{tpu_custom_call.1} parent=5 // pred_region
        %s1020 = ssub.s32 %s17, 2
        // Predicated region
        $region61: #{tpu_custom_call.1} parent=59 // pred_check
          %p1021 = pneg %p219
        $region62: #{tpu_custom_call.1} parent=59 // pred_check_branch
          %1023 = sbr.rel (%p1021) target = $region64
        $region63: #{tpu_custom_call.1} parent=59 // pred_region
          %s1024 = sand.u32 %s204, 1
          %s1025 = scalar_lea.sflag [#allocation3], %s1024
          %s1026 = sand.u32 %s204, 1
          %s1027 = smul.addr %s1026, 32
          %s1028 = scalar_lea.vmem [#allocation2], %s1027
          %1029 = dma.done %s1025, 512
        $region64: #{tpu_custom_call.1} parent=59 // pred_fallthru
          _
      $region60: #{tpu_custom_call.1} parent=5 // pred_fallthru
        _
    $region6: #{tpu_custom_call.1} parent=1 // loop_footer
      %s21 = sadd.s32 1, %s17
    $region7: #{tpu_custom_call.1} parent=1 // loop_footer_branch
      %16 = sbr.rel target = $region3
    $region8: #{tpu_custom_call.1} parent=1 // loop_exit
      _
    %1030 = vsyncpa [#allocation3], 1
    %s1031 = scalar_lea.sflag [#allocation3], 1
    %1032 = vsyncpa %s1031, 1

</llo_original>
